<compile_context>
chip_gen: v7x
topology: tpu7x:2x2x1
jax: 0.10.0
libtpu: 0.0.40
codegen_flags: <defaults>
</compile_context>

<pallas_src>
import jax
import jax.numpy as jnp
import numpy as np
from jax import lax
from jax.experimental import pallas as pl
from jax.experimental.pallas import tpu as pltpu


# ------------------------------ fused kernel --------------------------------

def _net_fused_kernel(x_ref, a1_ref, b1_ref, a2_ref, b2_ref,
                      f1w_ref, f1b_ref, f2w_ref, f2b_ref, f3w_ref, f3b_ref,
                      o_ref):
    def phase_max(h):
        # Columns are [phase0 | phase1 | phase2 | phase3]; 2x2 max-pool is the
        # elementwise max over the four phase blocks (static lane slices).
        w = h.shape[1] // 4
        return jnp.maximum(jnp.maximum(h[:, 0 * w:1 * w], h[:, 1 * w:2 * w]),
                           jnp.maximum(h[:, 2 * w:3 * w], h[:, 3 * w:4 * w]))

    # conv1 (as one matmul) + bias + relu, then 2x2 max-pool.
    h = jnp.dot(x_ref[...], a1_ref[...],
                preferred_element_type=jnp.float32) + b1_ref[...]
    h = phase_max(jnp.maximum(h, 0.0))                     # (TB, 3*4*4)

    # conv2 (as one matmul) + bias + relu, then 2x2 max-pool.
    h = jnp.dot(h, a2_ref[...],
                preferred_element_type=jnp.float32) + b2_ref[...]
    h = phase_max(jnp.maximum(h, 0.0))                     # (TB, 6*2*2) = flatten

    # fc1 -> relu -> fc2 -> relu -> fc3
    h = jnp.maximum(jnp.dot(h, f1w_ref[...],
                            preferred_element_type=jnp.float32) + f1b_ref[...],
                    0.0)
    h = jnp.maximum(jnp.dot(h, f2w_ref[...],
                            preferred_element_type=jnp.float32) + f2b_ref[...],
                    0.0)
    o_ref[...] = jnp.dot(h, f3w_ref[...],
                         preferred_element_type=jnp.float32) + f3b_ref[...]


# --------------------------- weight preparation ------------------------------

def _conv_pool_matrix(w, b, h, w_sp):
    """Dense matrix for a 3x3 pad-1 conv, output columns phase-major.

    Input feature order : ci*H*W + y*W + x          (NCHW flatten)
    Output column order : ((phase*Cout + co)*Ho + i)*Wo + j,
                          phase = dy*2+dx, conv output position (2i+dy, 2j+dx)
    so max over the 4 phase blocks == 2x2 max-pool, and the pooled layout is
    the plain (C, Ho, Wo) NCHW flatten expected downstream.
    """
    cout, cin, kh, kw = w.shape
    ho, wo = h // 2, w_sp // 2
    ncol = 4 * cout * ho * wo
    mat = np.zeros((cin * h * w_sp, ncol), np.float32)
    brow = np.zeros((1, ncol), np.float32)
    for dy in range(2):
        for dx in range(2):
            ph = dy * 2 + dx
            for co in range(cout):
                for i in range(ho):
                    for j in range(wo):
                        col = ((ph * cout + co) * ho + i) * wo + j
                        brow[0, col] = b[co]
                        yo, xo = 2 * i + dy, 2 * j + dx
                        for ci in range(cin):
                            for ki in range(kh):
                                for kj in range(kw):
                                    y, x = yo + ki - 1, xo + kj - 1
                                    if 0 <= y < h and 0 <= x < w_sp:
                                        mat[(ci * h + y) * w_sp + x, col] += \
                                            w[co, ci, ki, kj]
    return mat, brow


def prepare_params(params, h=8, w=8):
    """One-time host-side packing of all weights for the fused kernel."""
    (w1, b1, w2, b2, fw1, fb1, fw2, fb2, fw3, fb3) = [
        np.asarray(p, np.float32) for p in params]
    a1, b1r = _conv_pool_matrix(w1, b1, h, w)              # (64, 192), (1, 192)
    a2, b2r = _conv_pool_matrix(w2, b2, h // 2, w // 2)    # (48,  96), (1,  96)
    packed = (a1, b1r, a2, b2r,
              fw1.T, fb1.reshape(1, -1),
              fw2.T, fb2.reshape(1, -1),
              fw3.T, fb3.reshape(1, -1))
    return tuple(jnp.asarray(t, jnp.float32) for t in packed)


# --------------------------------- wrapper -----------------------------------

def net_forward(x, prepped):
    (a1, b1r, a2, b2r, f1w, f1b, f2w, f2b, f3w, f3b) = prepped
    n = x.shape[0]
    feat_in = a1.shape[0]                                  # Cin*H*W = 64
    n_out = f3w.shape[1]                                   # 2 classes
    x2d = x.reshape(n, feat_in)

    # Whole batch in one VMEM block when small; 256-row batch tiles (parallel
    # grid -> both TensorCores on v7x) for large batches.  Pad ragged batches.
    tb = n if n <= 256 else 256
    n_pad = pl.cdiv(n, tb) * tb
    if n_pad != n:
        x2d = jnp.pad(x2d, ((0, n_pad - n), (0, 0)))
    grid = (n_pad // tb,)

    def w_spec(arr):
        # Constant block index -> weights stay resident in VMEM across steps.
        return pl.BlockSpec(arr.shape, lambda i: (0, 0))

    out = pl.pallas_call(
        _net_fused_kernel,
        out_shape=jax.ShapeDtypeStruct((n_pad, n_out), jnp.float32),
        grid=grid,
        in_specs=[pl.BlockSpec((tb, feat_in), lambda i: (i, 0)),
                  w_spec(a1), w_spec(b1r), w_spec(a2), w_spec(b2r),
                  w_spec(f1w), w_spec(f1b), w_spec(f2w), w_spec(f2b),
                  w_spec(f3w), w_spec(f3b)],
        out_specs=pl.BlockSpec((tb, n_out), lambda i: (i, 0)),
        compiler_params=pltpu.CompilerParams(
            dimension_semantics=("parallel",)),
    )(x2d, a1, b1r, a2, b2r, f1w, f1b, f2w, f2b, f3w, f3b)
    return out[:n] if n_pad != n else out


# ------------------------------ pure-JAX check --------------------------------

def net_reference(x, params):
    (w1, b1, w2, b2, fw1, fb1, fw2, fb2, fw3, fb3) = params
    dn = ('NCHW', 'OIHW', 'NCHW')
    h = lax.conv_general_dilated(x, w1, (1, 1), ((1, 1), (1, 1)),
                                 dimension_numbers=dn,
                                 precision=lax.Precision.HIGHEST)
    h = jnp.maximum(h + b1.reshape(1, -1, 1, 1), 0.0)
    h = lax.reduce_window(h, -jnp.inf, lax.max, (1, 1, 2, 2), (1, 1, 2, 2),
                          'VALID')
    h = lax.conv_general_dilated(h, w2, (1, 1), ((1, 1), (1, 1)),
                                 dimension_numbers=dn,
                                 precision=lax.Precision.HIGHEST)
    h = jnp.maximum(h + b2.reshape(1, -1, 1, 1), 0.0)
    h = lax.reduce_window(h, -jnp.inf, lax.max, (1, 1, 2, 2), (1, 1, 2, 2),
                          'VALID')
    h = h.reshape(x.shape[0], -1)
    h = jnp.maximum(h @ fw1.T + fb1, 0.0)
    h = jnp.maximum(h @ fw2.T + fb2, 0.0)
    return h @ fw3.T + fb3


def init_params(key):
    ks = jax.random.split(key, 10)

    def rnd(k, shape, fan_in):
        return jax.random.normal(k, shape, jnp.float32) / np.sqrt(fan_in)

    w1 = rnd(ks[0], (3, 1, 3, 3), 9)
    b1 = rnd(ks[1], (3,), 9)
    w2 = rnd(ks[2], (6, 3, 3, 3), 27)
    b2 = rnd(ks[3], (6,), 27)
    fw1 = rnd(ks[4], (16, 24), 24)   # PyTorch Linear layout: (out, in)
    fb1 = rnd(ks[5], (16,), 24)
    fw2 = rnd(ks[6], (8, 16), 16)
    fb2 = rnd(ks[7], (8,), 16)
    fw3 = rnd(ks[8], (2, 8), 8)
    fb3 = rnd(ks[9], (2,), 8)
    return (w1, b1, w2, b2, fw1, fb1, fw2, fb2, fw3, fb3)


if __name__ == "__main__":
    key = jax.random.PRNGKey(0)
    k_x, k_p = jax.random.split(key)
    # fc1 expects 6*2*2 features after two 2x2 pools -> input is (N, 1, 8, 8).
    x = jax.random.normal(k_x, (2, 1, 8, 8), jnp.float32)
    params = init_params(k_p)
    prepped = prepare_params(params)          # one-time weight packing

    out = jax.block_until_ready(net_forward(x, prepped))
    ref = jax.block_until_ready(net_reference(x, params))

    assert out.shape == (2, 2), out.shape
    np.testing.assert_allclose(np.asarray(out), np.asarray(ref),
                               atol=1e-2, rtol=1e-2)
    print("KERNEL_OK")
</pallas_src>

<mosaic_0001>
module attributes {stable_mosaic.version = 11 : i64} {
  func.func @_net_fused_kernel(%arg0: i32, %arg1: memref<2x64xf32, #tpu.memory_space<vmem>>, %arg2: memref<64x192xf32, #tpu.memory_space<vmem>>, %arg3: memref<1x192xf32, #tpu.memory_space<vmem>>, %arg4: memref<48x96xf32, #tpu.memory_space<vmem>>, %arg5: memref<1x96xf32, #tpu.memory_space<vmem>>, %arg6: memref<24x16xf32, #tpu.memory_space<vmem>>, %arg7: memref<1x16xf32, #tpu.memory_space<vmem>>, %arg8: memref<16x8xf32, #tpu.memory_space<vmem>>, %arg9: memref<1x8xf32, #tpu.memory_space<vmem>>, %arg10: memref<8x2xf32, #tpu.memory_space<vmem>>, %arg11: memref<1x2xf32, #tpu.memory_space<vmem>>, %arg12: memref<2x2xf32, #tpu.memory_space<vmem>>) attributes {dimension_semantics = [#tpu.dimension_semantics<parallel>], iteration_bounds = array<i64: 1>, scalar_prefetch = 0 : i64, scratch_operands = 0 : i64, tpu.core_type = #tpu.core_type<tc>, window_params = [{transform_indices = @transform_0, window_bounds = array<i64: 2, 64>}, {pipeline_mode = #tpu.pipeline_mode<synchronous>, transform_indices = @transform_1, window_bounds = array<i64: 64, 192>}, {pipeline_mode = #tpu.pipeline_mode<synchronous>, transform_indices = @transform_2, window_bounds = array<i64: 1, 192>}, {pipeline_mode = #tpu.pipeline_mode<synchronous>, transform_indices = @transform_3, window_bounds = array<i64: 48, 96>}, {pipeline_mode = #tpu.pipeline_mode<synchronous>, transform_indices = @transform_4, window_bounds = array<i64: 1, 96>}, {pipeline_mode = #tpu.pipeline_mode<synchronous>, transform_indices = @transform_5, window_bounds = array<i64: 24, 16>}, {pipeline_mode = #tpu.pipeline_mode<synchronous>, transform_indices = @transform_6, window_bounds = array<i64: 1, 16>}, {pipeline_mode = #tpu.pipeline_mode<synchronous>, transform_indices = @transform_7, window_bounds = array<i64: 16, 8>}, {pipeline_mode = #tpu.pipeline_mode<synchronous>, transform_indices = @transform_8, window_bounds = array<i64: 1, 8>}, {pipeline_mode = #tpu.pipeline_mode<synchronous>, transform_indices = @transform_9, window_bounds = array<i64: 8, 2>}, {pipeline_mode = #tpu.pipeline_mode<synchronous>, transform_indices = @transform_10, window_bounds = array<i64: 1, 2>}, {transform_indices = @transform_11, window_bounds = array<i64: 2, 2>}]} {
    %c0 = arith.constant 0 : index
    %c0_0 = arith.constant 0 : index
    %0 = vector.load %arg1[%c0, %c0_0] : memref<2x64xf32, #tpu.memory_space<vmem>>, vector<2x64xf32>
    %c0_1 = arith.constant 0 : index
    %c0_2 = arith.constant 0 : index
    %1 = vector.load %arg2[%c0_1, %c0_2] : memref<64x192xf32, #tpu.memory_space<vmem>>, vector<64x192xf32>
    %cst = arith.constant dense<0.000000e+00> : vector<2x192xf32>
    %2 = tpu.matmul %0, %1, %cst {dimension_numbers = #tpu.dot_dimension_numbers<[1], [0], [0], [1], [0, 0, 1, 1], [], []>} : vector<2x64xf32>, vector<64x192xf32>, vector<2x192xf32> -> vector<2x192xf32>
    %c0_3 = arith.constant 0 : index
    %c0_4 = arith.constant 0 : index
    %3 = vector.load %arg3[%c0_3, %c0_4] : memref<1x192xf32, #tpu.memory_space<vmem>>, vector<1x192xf32>
    %4 = vector.broadcast %3 : vector<1x192xf32> to vector<2x192xf32>
    %5 = arith.addf %2, %4 : vector<2x192xf32>
    %cst_5 = arith.constant 0.000000e+00 : f32
    %6 = vector.broadcast %cst_5 : f32 to vector<2x192xf32>
    %7 = arith.maximumf %5, %6 : vector<2x192xf32>
    %8 = vector.extract_strided_slice %7 {offsets = [0, 0], sizes = [2, 48], strides = [1, 1]} : vector<2x192xf32> to vector<2x48xf32>
    %9 = vector.extract_strided_slice %7 {offsets = [0, 48], sizes = [2, 48], strides = [1, 1]} : vector<2x192xf32> to vector<2x48xf32>
    %10 = arith.maximumf %8, %9 : vector<2x48xf32>
    %11 = vector.extract_strided_slice %7 {offsets = [0, 96], sizes = [2, 48], strides = [1, 1]} : vector<2x192xf32> to vector<2x48xf32>
    %12 = vector.extract_strided_slice %7 {offsets = [0, 144], sizes = [2, 48], strides = [1, 1]} : vector<2x192xf32> to vector<2x48xf32>
    %13 = arith.maximumf %11, %12 : vector<2x48xf32>
    %14 = arith.maximumf %10, %13 : vector<2x48xf32>
    %c0_6 = arith.constant 0 : index
    %c0_7 = arith.constant 0 : index
    %15 = vector.load %arg4[%c0_6, %c0_7] : memref<48x96xf32, #tpu.memory_space<vmem>>, vector<48x96xf32>
    %cst_8 = arith.constant dense<0.000000e+00> : vector<2x96xf32>
    %16 = tpu.matmul %14, %15, %cst_8 {dimension_numbers = #tpu.dot_dimension_numbers<[1], [0], [0], [1], [0, 0, 1, 1], [], []>} : vector<2x48xf32>, vector<48x96xf32>, vector<2x96xf32> -> vector<2x96xf32>
    %c0_9 = arith.constant 0 : index
    %c0_10 = arith.constant 0 : index
    %17 = vector.load %arg5[%c0_9, %c0_10] : memref<1x96xf32, #tpu.memory_space<vmem>>, vector<1x96xf32>
    %18 = vector.broadcast %17 : vector<1x96xf32> to vector<2x96xf32>
    %19 = arith.addf %16, %18 : vector<2x96xf32>
    %cst_11 = arith.constant 0.000000e+00 : f32
    %20 = vector.broadcast %cst_11 : f32 to vector<2x96xf32>
    %21 = arith.maximumf %19, %20 : vector<2x96xf32>
    %22 = vector.extract_strided_slice %21 {offsets = [0, 0], sizes = [2, 24], strides = [1, 1]} : vector<2x96xf32> to vector<2x24xf32>
    %23 = vector.extract_strided_slice %21 {offsets = [0, 24], sizes = [2, 24], strides = [1, 1]} : vector<2x96xf32> to vector<2x24xf32>
    %24 = arith.maximumf %22, %23 : vector<2x24xf32>
    %25 = vector.extract_strided_slice %21 {offsets = [0, 48], sizes = [2, 24], strides = [1, 1]} : vector<2x96xf32> to vector<2x24xf32>
    %26 = vector.extract_strided_slice %21 {offsets = [0, 72], sizes = [2, 24], strides = [1, 1]} : vector<2x96xf32> to vector<2x24xf32>
    %27 = arith.maximumf %25, %26 : vector<2x24xf32>
    %28 = arith.maximumf %24, %27 : vector<2x24xf32>
    %c0_12 = arith.constant 0 : index
    %c0_13 = arith.constant 0 : index
    %29 = vector.load %arg6[%c0_12, %c0_13] : memref<24x16xf32, #tpu.memory_space<vmem>>, vector<24x16xf32>
    %cst_14 = arith.constant dense<0.000000e+00> : vector<2x16xf32>
    %30 = tpu.matmul %28, %29, %cst_14 {dimension_numbers = #tpu.dot_dimension_numbers<[1], [0], [0], [1], [0, 0, 1, 1], [], []>} : vector<2x24xf32>, vector<24x16xf32>, vector<2x16xf32> -> vector<2x16xf32>
    %c0_15 = arith.constant 0 : index
    %c0_16 = arith.constant 0 : index
    %31 = vector.load %arg7[%c0_15, %c0_16] : memref<1x16xf32, #tpu.memory_space<vmem>>, vector<1x16xf32>
    %32 = vector.broadcast %31 : vector<1x16xf32> to vector<2x16xf32>
    %33 = arith.addf %30, %32 : vector<2x16xf32>
    %cst_17 = arith.constant 0.000000e+00 : f32
    %34 = vector.broadcast %cst_17 : f32 to vector<2x16xf32>
    %35 = arith.maximumf %33, %34 : vector<2x16xf32>
    %c0_18 = arith.constant 0 : index
    %c0_19 = arith.constant 0 : index
    %36 = vector.load %arg8[%c0_18, %c0_19] : memref<16x8xf32, #tpu.memory_space<vmem>>, vector<16x8xf32>
    %cst_20 = arith.constant dense<0.000000e+00> : vector<2x8xf32>
    %37 = tpu.matmul %35, %36, %cst_20 {dimension_numbers = #tpu.dot_dimension_numbers<[1], [0], [0], [1], [0, 0, 1, 1], [], []>} : vector<2x16xf32>, vector<16x8xf32>, vector<2x8xf32> -> vector<2x8xf32>
    %c0_21 = arith.constant 0 : index
    %c0_22 = arith.constant 0 : index
    %38 = vector.load %arg9[%c0_21, %c0_22] : memref<1x8xf32, #tpu.memory_space<vmem>>, vector<1x8xf32>
    %39 = vector.broadcast %38 : vector<1x8xf32> to vector<2x8xf32>
    %40 = arith.addf %37, %39 : vector<2x8xf32>
    %cst_23 = arith.constant 0.000000e+00 : f32
    %41 = vector.broadcast %cst_23 : f32 to vector<2x8xf32>
    %42 = arith.maximumf %40, %41 : vector<2x8xf32>
    %c0_24 = arith.constant 0 : index
    %c0_25 = arith.constant 0 : index
    %43 = vector.load %arg10[%c0_24, %c0_25] : memref<8x2xf32, #tpu.memory_space<vmem>>, vector<8x2xf32>
    %cst_26 = arith.constant dense<0.000000e+00> : vector<2x2xf32>
    %44 = tpu.matmul %42, %43, %cst_26 {dimension_numbers = #tpu.dot_dimension_numbers<[1], [0], [0], [1], [0, 0, 1, 1], [], []>} : vector<2x8xf32>, vector<8x2xf32>, vector<2x2xf32> -> vector<2x2xf32>
    %c0_27 = arith.constant 0 : index
    %c0_28 = arith.constant 0 : index
    %45 = vector.load %arg11[%c0_27, %c0_28] : memref<1x2xf32, #tpu.memory_space<vmem>>, vector<1x2xf32>
    %46 = vector.broadcast %45 : vector<1x2xf32> to vector<2x2xf32>
    %47 = arith.addf %44, %46 : vector<2x2xf32>
    %c0_29 = arith.constant 0 : index
    %c0_30 = arith.constant 0 : index
    %48 = vector.load %arg12[%c0_29, %c0_30] : memref<2x2xf32, #tpu.memory_space<vmem>>, vector<2x2xf32>
    tpu.vector_store %arg12[%c0_29, %c0_30], %47 {strides = array<i32>} : memref<2x2xf32, #tpu.memory_space<vmem>>, vector<2x2xf32>,
    return
  }
  func.func @transform_0(%arg0: i32) -> (i32, i32) {
    %c0_i32 = arith.constant 0 : i32
    %c0_i32_0 = arith.constant 0 : i32
    return %arg0, %c0_i32 : i32, i32
  }
  func.func @transform_1(%arg0: i32) -> (i32, i32) {
    %c0_i32 = arith.constant 0 : i32
    %c0_i32_0 = arith.constant 0 : i32
    %c0_i32_1 = arith.constant 0 : i32
    return %c0_i32, %c0_i32_0 : i32, i32
  }
  func.func @transform_2(%arg0: i32) -> (i32, i32) {
    %c0_i32 = arith.constant 0 : i32
    %c0_i32_0 = arith.constant 0 : i32
    %c0_i32_1 = arith.constant 0 : i32
    return %c0_i32, %c0_i32_0 : i32, i32
  }
  func.func @transform_3(%arg0: i32) -> (i32, i32) {
    %c0_i32 = arith.constant 0 : i32
    %c0_i32_0 = arith.constant 0 : i32
    %c0_i32_1 = arith.constant 0 : i32
    return %c0_i32, %c0_i32_0 : i32, i32
  }
  func.func @transform_4(%arg0: i32) -> (i32, i32) {
    %c0_i32 = arith.constant 0 : i32
    %c0_i32_0 = arith.constant 0 : i32
    %c0_i32_1 = arith.constant 0 : i32
    return %c0_i32, %c0_i32_0 : i32, i32
  }
  func.func @transform_5(%arg0: i32) -> (i32, i32) {
    %c0_i32 = arith.constant 0 : i32
    %c0_i32_0 = arith.constant 0 : i32
    %c0_i32_1 = arith.constant 0 : i32
    return %c0_i32, %c0_i32_0 : i32, i32
  }
  func.func @transform_6(%arg0: i32) -> (i32, i32) {
    %c0_i32 = arith.constant 0 : i32
    %c0_i32_0 = arith.constant 0 : i32
    %c0_i32_1 = arith.constant 0 : i32
    return %c0_i32, %c0_i32_0 : i32, i32
  }
  func.func @transform_7(%arg0: i32) -> (i32, i32) {
    %c0_i32 = arith.constant 0 : i32
    %c0_i32_0 = arith.constant 0 : i32
    %c0_i32_1 = arith.constant 0 : i32
    return %c0_i32, %c0_i32_0 : i32, i32
  }
  func.func @transform_8(%arg0: i32) -> (i32, i32) {
    %c0_i32 = arith.constant 0 : i32
    %c0_i32_0 = arith.constant 0 : i32
    %c0_i32_1 = arith.constant 0 : i32
    return %c0_i32, %c0_i32_0 : i32, i32
  }
  func.func @transform_9(%arg0: i32) -> (i32, i32) {
    %c0_i32 = arith.constant 0 : i32
    %c0_i32_0 = arith.constant 0 : i32
    %c0_i32_1 = arith.constant 0 : i32
    return %c0_i32, %c0_i32_0 : i32, i32
  }
  func.func @transform_10(%arg0: i32) -> (i32, i32) {
    %c0_i32 = arith.constant 0 : i32
    %c0_i32_0 = arith.constant 0 : i32
    %c0_i32_1 = arith.constant 0 : i32
    return %c0_i32, %c0_i32_0 : i32, i32
  }
  func.func @transform_11(%arg0: i32) -> (i32, i32) {
    %c0_i32 = arith.constant 0 : i32
    %c0_i32_0 = arith.constant 0 : i32
    return %arg0, %c0_i32 : i32, i32
  }
}

</mosaic_0001>

<llo_original>
// kernel: tpu_custom_call.1
$region0: #{tpu_custom_call.1}
  #allocation0 [shape = 'u32[]', space=smem, size = 0x4, offset = 0x4, fixed_abs, tag = 'smem constant byte address 0x4 - core index']
  #allocation1 [shape = 'u32[144,128]{1,0:T(1,128)}', space=vmem, size = 0x12000, scoped, tag = 'internal scratch']
  %s0 = inlined_call_operand.vmem [shape: f32[2,64], index: 0, kind: input, shape index: {}]
  %s1 = inlined_call_operand.hbm [shape: f32[64,192], index: 1, kind: input, shape index: {}]
  %s2 = inlined_call_operand.vmem [shape: f32[1,192], index: 2, kind: input, shape index: {}]
  %s3 = inlined_call_operand.vmem [shape: f32[48,96], index: 3, kind: input, shape index: {}]
  %s4 = inlined_call_operand.vmem [shape: f32[1,96], index: 4, kind: input, shape index: {}]
  %s5 = inlined_call_operand.vmem [shape: f32[24,16], index: 5, kind: input, shape index: {}]
  %s6 = inlined_call_operand.vmem [shape: f32[1,16], index: 6, kind: input, shape index: {}]
  %s7 = inlined_call_operand.vmem [shape: f32[16,8], index: 7, kind: input, shape index: {}]
  %s8 = inlined_call_operand.vmem [shape: f32[1,8], index: 8, kind: input, shape index: {}]
  %s9 = inlined_call_operand.vmem [shape: f32[8,2], index: 9, kind: input, shape index: {}]
  %s10 = inlined_call_operand.vmem [shape: f32[1,2], index: 10, kind: input, shape index: {}]
  %s11 = inlined_call_operand.hbm [shape: f32[2,2], index: 11, kind: output, shape index: {}]
  %s12 = sld [smem:[#allocation0]]
  $region58: #{tpu_custom_call.1} parent=0
    _
  %s14 = ssub.s32 1, %s12
  %s15 = scalar_select 0, %s14, %s12
  $region1: #{tpu_custom_call.1} parent=0
    #allocation2 [shape = 'u8[65536]{0}', space=vmem, size = 0x10000, scoped, tag = 'input window, operand 1, single buffered']
    #allocation3 [shape = 's32[1]{0}', space=sflag, size = 0x4, scoped, tag = 'scoped memory for tpu_custom_call.1']
    #allocation4 [shape = 's32[1]{0}', space=sflag, size = 0x4, scoped, tag = 'scoped memory for tpu_custom_call.1']
    #allocation5 [shape = 'u8[1024]{0}', space=vmem, size = 0x400, scoped, tag = 'output window, operand 0, single buffered']
    %16 = vsyncpa [#allocation3], 0
    %17 = vsyncpa [#allocation4], 0
    // Predicated region
    $region2: #{tpu_custom_call.1} parent=1 // pred_check
      _
    $region3: #{tpu_custom_call.1} parent=1 // pred_check_branch
      %19 = sbr.rel (0) target = $region5
    $region4: #{tpu_custom_call.1} parent=1 // pred_region
      _
    $region5: #{tpu_custom_call.1} parent=1 // pred_fallthru
      _
    // Predicated region
    $region6: #{tpu_custom_call.1} parent=1 // pred_check
      _
    $region7: #{tpu_custom_call.1} parent=1 // pred_check_branch
      %21 = sbr.rel (0) target = $region9
    $region8: #{tpu_custom_call.1} parent=1 // pred_region
      %s23 = ssub.s32 2048, 2048
      %24 = vsyncadd [#allocation3], %s23
      %s25 = sshll.u32 [#allocation2], 4
      %s26 = int_to_ptr.vmem [resolvable:$true] %s25
      %31 = dma.hbm_to_vmem [thread:$0]  %s1, 2048, %s26, [#allocation3], 256, 256, 16
    $region9: #{tpu_custom_call.1} parent=1 // pred_fallthru
      _
    // Predicated region
    $region10: #{tpu_custom_call.1} parent=1 // pred_check
      _
    $region11: #{tpu_custom_call.1} parent=1 // pred_check_branch
      %33 = sbr.rel (0) target = $region13
    $region12: #{tpu_custom_call.1} parent=1 // pred_region
      _
    $region13: #{tpu_custom_call.1} parent=1 // pred_fallthru
      _
    // Predicated region
    $region14: #{tpu_custom_call.1} parent=1 // pred_check
      _
    $region15: #{tpu_custom_call.1} parent=1 // pred_check_branch
      %35 = sbr.rel (0) target = $region17
    $region16: #{tpu_custom_call.1} parent=1 // pred_region
      _
    $region17: #{tpu_custom_call.1} parent=1 // pred_fallthru
      _
    // Predicated region
    $region18: #{tpu_custom_call.1} parent=1 // pred_check
      _
    $region19: #{tpu_custom_call.1} parent=1 // pred_check_branch
      %37 = sbr.rel (0) target = $region21
    $region20: #{tpu_custom_call.1} parent=1 // pred_region
      _
    $region21: #{tpu_custom_call.1} parent=1 // pred_fallthru
      _
    // Predicated region
    $region22: #{tpu_custom_call.1} parent=1 // pred_check
      _
    $region23: #{tpu_custom_call.1} parent=1 // pred_check_branch
      %39 = sbr.rel (0) target = $region25
    $region24: #{tpu_custom_call.1} parent=1 // pred_region
      _
    $region25: #{tpu_custom_call.1} parent=1 // pred_fallthru
      _
    // Predicated region
    $region26: #{tpu_custom_call.1} parent=1 // pred_check
      _
    $region27: #{tpu_custom_call.1} parent=1 // pred_check_branch
      %41 = sbr.rel (0) target = $region29
    $region28: #{tpu_custom_call.1} parent=1 // pred_region
      _
    $region29: #{tpu_custom_call.1} parent=1 // pred_fallthru
      _
    // Predicated region
    $region30: #{tpu_custom_call.1} parent=1 // pred_check
      _
    $region31: #{tpu_custom_call.1} parent=1 // pred_check_branch
      %43 = sbr.rel (0) target = $region33
    $region32: #{tpu_custom_call.1} parent=1 // pred_region
      _
    $region33: #{tpu_custom_call.1} parent=1 // pred_fallthru
      _
    // Predicated region
    $region34: #{tpu_custom_call.1} parent=1 // pred_check
      _
    $region35: #{tpu_custom_call.1} parent=1 // pred_check_branch
      %45 = sbr.rel (0) target = $region37
    $region36: #{tpu_custom_call.1} parent=1 // pred_region
      _
    $region37: #{tpu_custom_call.1} parent=1 // pred_fallthru
      _
    // Predicated region
    $region38: #{tpu_custom_call.1} parent=1 // pred_check
      _
    $region39: #{tpu_custom_call.1} parent=1 // pred_check_branch
      %47 = sbr.rel (0) target = $region41
    $region40: #{tpu_custom_call.1} parent=1 // pred_region
      _
    $region41: #{tpu_custom_call.1} parent=1 // pred_fallthru
      _
    // Predicated region
    $region42: #{tpu_custom_call.1} parent=1 // pred_check
      _
    $region43: #{tpu_custom_call.1} parent=1 // pred_check_branch
      %49 = sbr.rel (0) target = $region45
    $region44: #{tpu_custom_call.1} parent=1 // pred_region
      _
    $region45: #{tpu_custom_call.1} parent=1 // pred_fallthru
      _
    // Predicated region
    $region46: #{tpu_custom_call.1} parent=1 // pred_check
      _
    $region47: #{tpu_custom_call.1} parent=1 // pred_check_branch
      %51 = sbr.rel (0) target = $region49
    $region48: #{tpu_custom_call.1} parent=1 // pred_region
      %52 = dma.done [#allocation3], 2048
    $region49: #{tpu_custom_call.1} parent=1 // pred_fallthru
      _
    %v53 = vld [vmem:[%s0] sm:$0x3]
    %v54 = vld [vmem:[#allocation2] sm:$0xff]
    %v55 = vld [vmem:[#allocation2 + $0x8] sm:$0xff]
    %v56 = vld [vmem:[#allocation2 + $0x10] sm:$0xff]
    %v57 = vld [vmem:[#allocation2 + $0x18] sm:$0xff]
    %v58 = vld [vmem:[#allocation2 + $0x20] sm:$0xff]
    %v59 = vld [vmem:[#allocation2 + $0x28] sm:$0xff]
    %v60 = vld [vmem:[#allocation2 + $0x30] sm:$0xff]
    %v61 = vld [vmem:[#allocation2 + $0x38] sm:$0xff]
    %v62 = vld [vmem:[#allocation2 + $0x40] sm:$0xff]
    %v63 = vld [vmem:[#allocation2 + $0x48] sm:$0xff]
    %v64 = vld [vmem:[#allocation2 + $0x50] sm:$0xff]
    %v65 = vld [vmem:[#allocation2 + $0x58] sm:$0xff]
    %v66 = vld [vmem:[#allocation2 + $0x60] sm:$0xff]
    %v67 = vld [vmem:[#allocation2 + $0x68] sm:$0xff]
    %v68 = vld [vmem:[#allocation2 + $0x70] sm:$0xff]
    %v69 = vld [vmem:[#allocation2 + $0x78] sm:$0xff]
    %v70 = vld [vmem:[%s2] sm:$0x3]
    %v72 = vlaneseq
    %v73 = vshrl.u32 %v72, 7
    %v74 = vsub.s32 0, %v73
    %v75 = vrot.slane %v70, %v74
    %v76 = vlaneseq
    %v77 = vshrl.u32 %v76, 7
    %v78 = vsub.s32 1, %v77
    %v79 = vrot.slane %v70, %v78
    %vm82 = vcmask 523264
    %v84 = vsel %vm82, %v53, 0
    %86 = vmatprep.subr.mxu0 %v55
    %87 = vmatpush1.msra.mxu0 %v54
    %88 = vmatprep.subr.mxu0 %v57
    %89 = vmatpush1.msra.mxu0 %v56
    %90 = vmatprep.subr.mxu0 %v59
    %91 = vmatpush1.msra.mxu0 %v58
    %92 = vmatprep.subr.mxu0 %v61
    %93 = vmatpush1.msra.mxu0 %v60
    %94 = vmatprep.subr.mxu0 %v63
    %95 = vmatpush1.msra.mxu0 %v62
    %96 = vmatprep.subr.mxu0 %v65
    %97 = vmatpush1.msra.mxu0 %v64
    %98 = vmatprep.subr.mxu0 %v67
    %99 = vmatpush1.msra.mxu0 %v66
    %100 = vmatprep.subr.mxu0 %v69
    %101 = vmatpush1.msra.mxu0 %v68
    %102 = vmatprep.subr.mxu0 0.0
    %103 = vmatpush1.msra.mxu0 0.0
    %104 = vmatprep.subr.mxu0 0.0
    %105 = vmatpush1.msra.mxu0 0.0
    %106 = vmatprep.subr.mxu0 0.0
    %107 = vmatpush1.msra.mxu0 0.0
    %108 = vmatprep.subr.mxu0 0.0
    %109 = vmatpush1.msra.mxu0 0.0
    %110 = vmatprep.subr.mxu0 0.0
    %111 = vmatpush1.msra.mxu0 0.0
    %112 = vmatprep.subr.mxu0 0.0
    %113 = vmatpush1.msra.mxu0 0.0
    %114 = vmatprep.subr.mxu0 0.0
    %115 = vmatpush1.msra.mxu0 0.0
    %116 = vmatprep.subr.mxu0 0.0
    %117 = vmatpush1.msra.mxu0 0.0
    %118 = vmatprep.subr.mxu0 0.0
    %119 = vmatpush1.msra.mxu0 0.0
    %120 = vmatprep.subr.mxu0 0.0
    %121 = vmatpush1.msra.mxu0 0.0
    %122 = vmatprep.subr.mxu0 0.0
    %123 = vmatpush1.msra.mxu0 0.0
    %124 = vmatprep.subr.mxu0 0.0
    %125 = vmatpush1.msra.mxu0 0.0
    %126 = vmatprep.subr.mxu0 0.0
    %127 = vmatpush1.msra.mxu0 0.0
    %128 = vmatprep.subr.mxu0 0.0
    %129 = vmatpush1.msra.mxu0 0.0
    %130 = vmatprep.subr.mxu0 0.0
    %131 = vmatpush1.msra.mxu0 0.0
    %132 = vmatprep.subr.mxu0 0.0
    %133 = vmatpush1.msra.mxu0 0.0
    %134 = vmatprep.subr.mxu0 0.0
    %135 = vmatpush1.msra.mxu0 0.0
    %136 = vmatprep.subr.mxu0 0.0
    %137 = vmatpush1.msra.mxu0 0.0
    %138 = vmatprep.subr.mxu0 0.0
    %139 = vmatpush1.msra.mxu0 0.0
    %140 = vmatprep.subr.mxu0 0.0
    %141 = vmatpush1.msra.mxu0 0.0
    %142 = vmatprep.subr.mxu0 0.0
    %143 = vmatpush1.msra.mxu0 0.0
    %144 = vmatprep.subr.mxu0 0.0
    %145 = vmatpush1.msra.mxu0 0.0
    %146 = vmatprep.subr.mxu0 0.0
    %147 = vmatpush1.msra.mxu0 0.0
    %148 = vmatprep.subr.mxu0 0.0
    %149 = vmatpush1.msra.mxu0 0.0
    %150 = vmatprep.mubr.f32.mxu0 0.0
    %151 = vmatmul.mubr.f32.gmra.mrb[0].mxu0 %v84
    %v152 = vpop.f32.mrb[0].mxu0
    %v153 = vadd.f32 %v75, %v152
    %v154 = vpop.f32.mrb[0].mxu0
    %v155 = vadd.f32 %v79, %v154
    %156 = vdwg.mxu0
    %v157 = vmax.f32 %v153, 0.0
    %v158 = vmax.f32 %v155, 0.0
    %160 = vrot.lane.b32.xlu0 %v157, 80
    %v161 = vpop.permute.xlu0 %160
    %v163 = vmax.f32 %v157, %v161
    %165 = vrot.lane.b32.xlu0 %v158, 80
    %v166 = vpop.permute.xlu0 %165
    %v168 = vmax.f32 %v157, %v166
    %v169 = vmax.f32 %v158, %v166
    %172 = vrot.lane.b32.xlu0 %v168, 32
    %v173 = vpop.permute.xlu0 %172
    %174 = vrot.lane.b32.xlu0 %v169, 32
    %v175 = vpop.permute.xlu0 %174
    %vm176 = vcmask 261120
    %v177 = vsel %vm176, %v173, %v175
    %v179 = vmax.f32 %v163, %v177
    %v180 = vld [vmem:[%s3] sm:$0xff]
    %v181 = vld [vmem:[%s3 + $0x8] sm:$0xff]
    %v182 = vld [vmem:[%s3 + $0x10] sm:$0xff]
    %v183 = vld [vmem:[%s3 + $0x18] sm:$0xff]
    %v184 = vld [vmem:[%s3 + $0x20] sm:$0xff]
    %v185 = vld [vmem:[%s3 + $0x28] sm:$0xff]
    %v186 = vld [vmem:[%s4] sm:$0x1]
    %v188 = vlaneseq
    %v189 = vshrl.u32 %v188, 7
    %v190 = vsub.s32 0, %v189
    %v191 = vrot.slane %v186, %v190
    %vm193 = vcmask 392192
    %v195 = vsel %vm193, %v179, 0
    %197 = vmatprep.subr.mxu0 0.0
    %198 = vmatpush1.msra.mxu0 %v180
    %199 = vmatprep.subr.mxu0 0.0
    %200 = vmatpush1.msra.mxu0 %v181
    %201 = vmatprep.subr.mxu0 0.0
    %202 = vmatpush1.msra.mxu0 %v182
    %203 = vmatprep.subr.mxu0 0.0
    %204 = vmatpush1.msra.mxu0 %v183
    %205 = vmatprep.subr.mxu0 0.0
    %206 = vmatpush1.msra.mxu0 %v184
    %207 = vmatprep.subr.mxu0 0.0
    %208 = vmatpush1.msra.mxu0 %v185
    %209 = vmatprep.subr.mxu0 0.0
    %210 = vmatpush1.msra.mxu0 0.0
    %211 = vmatprep.subr.mxu0 0.0
    %212 = vmatpush1.msra.mxu0 0.0
    %213 = vmatprep.subr.mxu0 0.0
    %214 = vmatpush1.msra.mxu0 0.0
    %215 = vmatprep.subr.mxu0 0.0
    %216 = vmatpush1.msra.mxu0 0.0
    %217 = vmatprep.subr.mxu0 0.0
    %218 = vmatpush1.msra.mxu0 0.0
    %219 = vmatprep.subr.mxu0 0.0
    %220 = vmatpush1.msra.mxu0 0.0
    %221 = vmatprep.subr.mxu0 0.0
    %222 = vmatpush1.msra.mxu0 0.0
    %223 = vmatprep.subr.mxu0 0.0
    %224 = vmatpush1.msra.mxu0 0.0
    %225 = vmatprep.subr.mxu0 0.0
    %226 = vmatpush1.msra.mxu0 0.0
    %227 = vmatprep.subr.mxu0 0.0
    %228 = vmatpush1.msra.mxu0 0.0
    %229 = vmatprep.subr.mxu0 0.0
    %230 = vmatpush1.msra.mxu0 0.0
    %231 = vmatprep.subr.mxu0 0.0
    %232 = vmatpush1.msra.mxu0 0.0
    %233 = vmatprep.subr.mxu0 0.0
    %234 = vmatpush1.msra.mxu0 0.0
    %235 = vmatprep.subr.mxu0 0.0
    %236 = vmatpush1.msra.mxu0 0.0
    %237 = vmatprep.subr.mxu0 0.0
    %238 = vmatpush1.msra.mxu0 0.0
    %239 = vmatprep.subr.mxu0 0.0
    %240 = vmatpush1.msra.mxu0 0.0
    %241 = vmatprep.subr.mxu0 0.0
    %242 = vmatpush1.msra.mxu0 0.0
    %243 = vmatprep.subr.mxu0 0.0
    %244 = vmatpush1.msra.mxu0 0.0
    %245 = vmatprep.subr.mxu0 0.0
    %246 = vmatpush1.msra.mxu0 0.0
    %247 = vmatprep.subr.mxu0 0.0
    %248 = vmatpush1.msra.mxu0 0.0
    %249 = vmatprep.subr.mxu0 0.0
    %250 = vmatpush1.msra.mxu0 0.0
    %251 = vmatprep.subr.mxu0 0.0
    %252 = vmatpush1.msra.mxu0 0.0
    %253 = vmatprep.subr.mxu0 0.0
    %254 = vmatpush1.msra.mxu0 0.0
    %255 = vmatprep.subr.mxu0 0.0
    %256 = vmatpush1.msra.mxu0 0.0
    %257 = vmatprep.subr.mxu0 0.0
    %258 = vmatpush1.msra.mxu0 0.0
    %259 = vmatprep.subr.mxu0 0.0
    %260 = vmatpush1.msra.mxu0 0.0
    %261 = vmatprep.mubr.f32.mxu0 0.0
    %262 = vmatmul.mubr.f32.gmra.mrb[0].mxu0 %v195
    %v263 = vpop.f32.mrb[0].mxu0
    %v264 = vadd.f32 %v191, %v263
    %v265 = vpop.f32.mrb[0].mxu0
    %266 = vdwg.mxu0
    %v267 = vmax.f32 %v264, 0.0
    %269 = vrot.lane.b32.xlu0 %v267, 104
    %v270 = vpop.permute.xlu0 %269
    %v272 = vmax.f32 %v267, %v270
    %274 = vrot.lane.b32.xlu0 %v272, 80
    %v275 = vpop.permute.xlu0 %274
    %v277 = vmax.f32 %v272, %v275
    %v278 = vld [vmem:[%s5] sm:$0xff]
    %v279 = vld [vmem:[%s5 + $0x8] sm:$0xff]
    %v280 = vld [vmem:[%s5 + $0x10] sm:$0xff]
    %v281 = vld [vmem:[%s6] sm:$0x1]
    %v283 = vlaneseq
    %v284 = vshrl.u32 %v283, 7
    %v285 = vsub.s32 0, %v284
    %v286 = vrot.slane %v281, %v285
    %vm288 = vcmask 195584
    %v290 = vsel %vm288, %v277, 0
    %292 = vmatprep.subr.mxu0 0.0
    %293 = vmatpush1.msra.mxu0 %v278
    %294 = vmatprep.subr.mxu0 0.0
    %295 = vmatpush1.msra.mxu0 %v279
    %296 = vmatprep.subr.mxu0 0.0
    %297 = vmatpush1.msra.mxu0 %v280
    %298 = vmatprep.subr.mxu0 0.0
    %299 = vmatpush1.msra.mxu0 0.0
    %300 = vmatprep.subr.mxu0 0.0
    %301 = vmatpush1.msra.mxu0 0.0
    %302 = vmatprep.subr.mxu0 0.0
    %303 = vmatpush1.msra.mxu0 0.0
    %304 = vmatprep.subr.mxu0 0.0
    %305 = vmatpush1.msra.mxu0 0.0
    %306 = vmatprep.subr.mxu0 0.0
    %307 = vmatpush1.msra.mxu0 0.0
    %308 = vmatprep.subr.mxu0 0.0
    %309 = vmatpush1.msra.mxu0 0.0
    %310 = vmatprep.subr.mxu0 0.0
    %311 = vmatpush1.msra.mxu0 0.0
    %312 = vmatprep.subr.mxu0 0.0
    %313 = vmatpush1.msra.mxu0 0.0
    %314 = vmatprep.subr.mxu0 0.0
    %315 = vmatpush1.msra.mxu0 0.0
    %316 = vmatprep.subr.mxu0 0.0
    %317 = vmatpush1.msra.mxu0 0.0
    %318 = vmatprep.subr.mxu0 0.0
    %319 = vmatpush1.msra.mxu0 0.0
    %320 = vmatprep.subr.mxu0 0.0
    %321 = vmatpush1.msra.mxu0 0.0
    %322 = vmatprep.subr.mxu0 0.0
    %323 = vmatpush1.msra.mxu0 0.0
    %324 = vmatprep.subr.mxu0 0.0
    %325 = vmatpush1.msra.mxu0 0.0
    %326 = vmatprep.subr.mxu0 0.0
    %327 = vmatpush1.msra.mxu0 0.0
    %328 = vmatprep.subr.mxu0 0.0
    %329 = vmatpush1.msra.mxu0 0.0
    %330 = vmatprep.subr.mxu0 0.0
    %331 = vmatpush1.msra.mxu0 0.0
    %332 = vmatprep.subr.mxu0 0.0
    %333 = vmatpush1.msra.mxu0 0.0
    %334 = vmatprep.subr.mxu0 0.0
    %335 = vmatpush1.msra.mxu0 0.0
    %336 = vmatprep.subr.mxu0 0.0
    %337 = vmatpush1.msra.mxu0 0.0
    %338 = vmatprep.subr.mxu0 0.0
    %339 = vmatpush1.msra.mxu0 0.0
    %340 = vmatprep.subr.mxu0 0.0
    %341 = vmatpush1.msra.mxu0 0.0
    %342 = vmatprep.subr.mxu0 0.0
    %343 = vmatpush1.msra.mxu0 0.0
    %344 = vmatprep.subr.mxu0 0.0
    %345 = vmatpush1.msra.mxu0 0.0
    %346 = vmatprep.subr.mxu0 0.0
    %347 = vmatpush1.msra.mxu0 0.0
    %348 = vmatprep.subr.mxu0 0.0
    %349 = vmatpush1.msra.mxu0 0.0
    %350 = vmatprep.subr.mxu0 0.0
    %351 = vmatpush1.msra.mxu0 0.0
    %352 = vmatprep.subr.mxu0 0.0
    %353 = vmatpush1.msra.mxu0 0.0
    %354 = vmatprep.subr.mxu0 0.0
    %355 = vmatpush1.msra.mxu0 0.0
    %356 = vmatprep.mubr.f32.mxu0 0.0
    %357 = vmatmul.mubr.f32.gmra.mrb[0].mxu0 %v290
    %v358 = vpop.f32.mrb[0].mxu0
    %v359 = vadd.f32 %v286, %v358
    %v360 = vpop.f32.mrb[0].mxu0
    %361 = vdwg.mxu0
    %v362 = vmax.f32 %v359, 0.0
    %v363 = vld [vmem:[%s7] sm:$0xff]
    %v364 = vld [vmem:[%s7 + $0x8] sm:$0xff]
    %v365 = vld [vmem:[%s8] sm:$0x1]
    %v367 = vlaneseq
    %v368 = vshrl.u32 %v367, 7
    %v369 = vsub.s32 0, %v368
    %v370 = vrot.slane %v365, %v369
    %vm372 = vcmask 130048
    %v374 = vsel %vm372, %v362, 0
    %376 = vmatprep.subr.mxu0 0.0
    %377 = vmatpush1.msra.mxu0 %v363
    %378 = vmatprep.subr.mxu0 0.0
    %379 = vmatpush1.msra.mxu0 %v364
    %380 = vmatprep.subr.mxu0 0.0
    %381 = vmatpush1.msra.mxu0 0.0
    %382 = vmatprep.subr.mxu0 0.0
    %383 = vmatpush1.msra.mxu0 0.0
    %384 = vmatprep.subr.mxu0 0.0
    %385 = vmatpush1.msra.mxu0 0.0
    %386 = vmatprep.subr.mxu0 0.0
    %387 = vmatpush1.msra.mxu0 0.0
    %388 = vmatprep.subr.mxu0 0.0
    %389 = vmatpush1.msra.mxu0 0.0
    %390 = vmatprep.subr.mxu0 0.0
    %391 = vmatpush1.msra.mxu0 0.0
    %392 = vmatprep.subr.mxu0 0.0
    %393 = vmatpush1.msra.mxu0 0.0
    %394 = vmatprep.subr.mxu0 0.0
    %395 = vmatpush1.msra.mxu0 0.0
    %396 = vmatprep.subr.mxu0 0.0
    %397 = vmatpush1.msra.mxu0 0.0
    %398 = vmatprep.subr.mxu0 0.0
    %399 = vmatpush1.msra.mxu0 0.0
    %400 = vmatprep.subr.mxu0 0.0
    %401 = vmatpush1.msra.mxu0 0.0
    %402 = vmatprep.subr.mxu0 0.0
    %403 = vmatpush1.msra.mxu0 0.0
    %404 = vmatprep.subr.mxu0 0.0
    %405 = vmatpush1.msra.mxu0 0.0
    %406 = vmatprep.subr.mxu0 0.0
    %407 = vmatpush1.msra.mxu0 0.0
    %408 = vmatprep.subr.mxu0 0.0
    %409 = vmatpush1.msra.mxu0 0.0
    %410 = vmatprep.subr.mxu0 0.0
    %411 = vmatpush1.msra.mxu0 0.0
    %412 = vmatprep.subr.mxu0 0.0
    %413 = vmatpush1.msra.mxu0 0.0
    %414 = vmatprep.subr.mxu0 0.0
    %415 = vmatpush1.msra.mxu0 0.0
    %416 = vmatprep.subr.mxu0 0.0
    %417 = vmatpush1.msra.mxu0 0.0
    %418 = vmatprep.subr.mxu0 0.0
    %419 = vmatpush1.msra.mxu0 0.0
    %420 = vmatprep.subr.mxu0 0.0
    %421 = vmatpush1.msra.mxu0 0.0
    %422 = vmatprep.subr.mxu0 0.0
    %423 = vmatpush1.msra.mxu0 0.0
    %424 = vmatprep.subr.mxu0 0.0
    %425 = vmatpush1.msra.mxu0 0.0
    %426 = vmatprep.subr.mxu0 0.0
    %427 = vmatpush1.msra.mxu0 0.0
    %428 = vmatprep.subr.mxu0 0.0
    %429 = vmatpush1.msra.mxu0 0.0
    %430 = vmatprep.subr.mxu0 0.0
    %431 = vmatpush1.msra.mxu0 0.0
    %432 = vmatprep.subr.mxu0 0.0
    %433 = vmatpush1.msra.mxu0 0.0
    %434 = vmatprep.subr.mxu0 0.0
    %435 = vmatpush1.msra.mxu0 0.0
    %436 = vmatprep.subr.mxu0 0.0
    %437 = vmatpush1.msra.mxu0 0.0
    %438 = vmatprep.subr.mxu0 0.0
    %439 = vmatpush1.msra.mxu0 0.0
    %440 = vmatprep.mubr.f32.mxu0 0.0
    %441 = vmatmul.mubr.f32.gmra.mrb[0].mxu0 %v374
    %v442 = vpop.f32.mrb[0].mxu0
    %v443 = vadd.f32 %v370, %v442
    %v444 = vpop.f32.mrb[0].mxu0
    %445 = vdwg.mxu0
    %v446 = vmax.f32 %v443, 0.0
    %v447 = vld [vmem:[%s9] sm:$0xff]
    %v448 = vld [vmem:[%s10] sm:$0x1]
    %v450 = vlaneseq
    %v451 = vshrl.u32 %v450, 7
    %v452 = vsub.s32 0, %v451
    %v453 = vrot.slane %v448, %v452
    %vm455 = vcmask 64512
    %v457 = vsel %vm455, %v446, 0
    %459 = vmatprep.subr.mxu0 0.0
    %460 = vmatpush1.msra.mxu0 %v447
    %461 = vmatprep.subr.mxu0 0.0
    %462 = vmatpush1.msra.mxu0 0.0
    %463 = vmatprep.subr.mxu0 0.0
    %464 = vmatpush1.msra.mxu0 0.0
    %465 = vmatprep.subr.mxu0 0.0
    %466 = vmatpush1.msra.mxu0 0.0
    %467 = vmatprep.subr.mxu0 0.0
    %468 = vmatpush1.msra.mxu0 0.0
    %469 = vmatprep.subr.mxu0 0.0
    %470 = vmatpush1.msra.mxu0 0.0
    %471 = vmatprep.subr.mxu0 0.0
    %472 = vmatpush1.msra.mxu0 0.0
    %473 = vmatprep.subr.mxu0 0.0
    %474 = vmatpush1.msra.mxu0 0.0
    %475 = vmatprep.subr.mxu0 0.0
    %476 = vmatpush1.msra.mxu0 0.0
    %477 = vmatprep.subr.mxu0 0.0
    %478 = vmatpush1.msra.mxu0 0.0
    %479 = vmatprep.subr.mxu0 0.0
    %480 = vmatpush1.msra.mxu0 0.0
    %481 = vmatprep.subr.mxu0 0.0
    %482 = vmatpush1.msra.mxu0 0.0
    %483 = vmatprep.subr.mxu0 0.0
    %484 = vmatpush1.msra.mxu0 0.0
    %485 = vmatprep.subr.mxu0 0.0
    %486 = vmatpush1.msra.mxu0 0.0
    %487 = vmatprep.subr.mxu0 0.0
    %488 = vmatpush1.msra.mxu0 0.0
    %489 = vmatprep.subr.mxu0 0.0
    %490 = vmatpush1.msra.mxu0 0.0
    %491 = vmatprep.subr.mxu0 0.0
    %492 = vmatpush1.msra.mxu0 0.0
    %493 = vmatprep.subr.mxu0 0.0
    %494 = vmatpush1.msra.mxu0 0.0
    %495 = vmatprep.subr.mxu0 0.0
    %496 = vmatpush1.msra.mxu0 0.0
    %497 = vmatprep.subr.mxu0 0.0
    %498 = vmatpush1.msra.mxu0 0.0
    %499 = vmatprep.subr.mxu0 0.0
    %500 = vmatpush1.msra.mxu0 0.0
    %501 = vmatprep.subr.mxu0 0.0
    %502 = vmatpush1.msra.mxu0 0.0
    %503 = vmatprep.subr.mxu0 0.0
    %504 = vmatpush1.msra.mxu0 0.0
    %505 = vmatprep.subr.mxu0 0.0
    %506 = vmatpush1.msra.mxu0 0.0
    %507 = vmatprep.subr.mxu0 0.0
    %508 = vmatpush1.msra.mxu0 0.0
    %509 = vmatprep.subr.mxu0 0.0
    %510 = vmatpush1.msra.mxu0 0.0
    %511 = vmatprep.subr.mxu0 0.0
    %512 = vmatpush1.msra.mxu0 0.0
    %513 = vmatprep.subr.mxu0 0.0
    %514 = vmatpush1.msra.mxu0 0.0
    %515 = vmatprep.subr.mxu0 0.0
    %516 = vmatpush1.msra.mxu0 0.0
    %517 = vmatprep.subr.mxu0 0.0
    %518 = vmatpush1.msra.mxu0 0.0
    %519 = vmatprep.subr.mxu0 0.0
    %520 = vmatpush1.msra.mxu0 0.0
    %521 = vmatprep.subr.mxu0 0.0
    %522 = vmatpush1.msra.mxu0 0.0
    %523 = vmatprep.mubr.f32.mxu0 0.0
    %524 = vmatmul.mubr.f32.gmra.mrb[0].mxu0 %v457
    %v525 = vpop.f32.mrb[0].mxu0
    %v526 = vadd.f32 %v453, %v525
    %v527 = vpop.f32.mrb[0].mxu0
    %528 = vdwg.mxu0
    %vm529 = vcmask 9216
    %530 = vst.msk [vmem:[#allocation5] sm:$0x3] %vm529, %v526
    // Predicated region
    $region50: #{tpu_custom_call.1} parent=1 // pred_check
      _
    $region51: #{tpu_custom_call.1} parent=1 // pred_check_branch
      %532 = sbr.rel (0) target = $region53
    $region52: #{tpu_custom_call.1} parent=1 // pred_region
      %s534 = ssub.s32 32, 32
      %535 = vsyncadd [#allocation4], %s534
      %s537 = sshll.u32 [#allocation5], 4
      %s538 = int_to_ptr.vmem [resolvable:$true] %s537
      %540 = dma.vmem_to_hbm [thread:$0]  %s538, 32, %s11, [#allocation4]
    $region53: #{tpu_custom_call.1} parent=1 // pred_fallthru
      _
    // Predicated region
    $region54: #{tpu_custom_call.1} parent=1 // pred_check
      _
    $region55: #{tpu_custom_call.1} parent=1 // pred_check_branch
      %542 = sbr.rel (0) target = $region57
    $region56: #{tpu_custom_call.1} parent=1 // pred_region
      %543 = dma.done [#allocation4], 32
    $region57: #{tpu_custom_call.1} parent=1 // pred_fallthru
      _
    %544 = vsyncpa [#allocation3], 1
    %545 = vsyncpa [#allocation4], 1

</llo_original>
